<compile_context>
chip_gen: v6e
topology: v6e:2x2x1
jax: 0.10.0
libtpu: 0.0.40
codegen_flags: <defaults>
</compile_context>

<pallas_src>
import jax
import jax.numpy as jnp
from jax.experimental import pallas as pl
from jax.experimental.pallas import tpu as pltpu


# ---------------------------------------------------------------------------
# Fused kernel: squeeze + excitation + scale for one sample's (C, HW) slab.
# ---------------------------------------------------------------------------
def _se_fused_kernel(x_ref, w1_ref, w2_ref, o_ref):
    x = x_ref[0]                                                   # (C, HW) native dtype
    # squeeze: mean over spatial (lane) axis in f32.
    pooled = jnp.mean(x.astype(jnp.float32), axis=-1, keepdims=True)   # (C, 1)
    # excitation: column-vector matmuls against VMEM-resident weights.
    h = jnp.dot(w1_ref[...], pooled, preferred_element_type=jnp.float32)  # (Cr, 1)
    h = jnp.maximum(h, 0.0)
    s = jnp.dot(w2_ref[...], h, preferred_element_type=jnp.float32)       # (C, 1)
    g = jax.nn.sigmoid(s)                                                  # (C, 1) f32
    # scale: broadcast gate over HW; keep gate in f32 (no premature rounding).
    o_ref[0] = (x * g).astype(o_ref.dtype)


# ---------------------------------------------------------------------------
# Fallback streaming scale kernel (x viewed as (B*C, HW)).
# ---------------------------------------------------------------------------
def _se_scale_kernel(x_ref, g_ref, o_ref):
    o_ref[...] = (x_ref[...] * g_ref[...]).astype(o_ref.dtype)


# ---------------------------------------------------------------------------
# Generation-aware VMEM / block-size budget.
# ---------------------------------------------------------------------------
def _vmem_budget():
    """Returns (target_block_bytes, vmem_limit_bytes)."""
    try:
        vmem = getattr(pltpu.get_tpu_info(), "vmem_capacity_bytes", 0) or 0
    except Exception:
        vmem = 0
    if vmem >= 128 * 1024 * 1024:
        # v5e / v6e: plenty of VMEM; 4 MiB tiles are at/near roofline.
        return 4 * 1024 * 1024, 64 * 1024 * 1024
    if vmem > 0:
        # v7x (64 MiB per TC): big tiles to amortize step cost at 3.2 TB/s.
        return 6 * 1024 * 1024, 44 * 1024 * 1024
    # Unknown chip: conservative defaults.
    return 2 * 1024 * 1024, 32 * 1024 * 1024


# ---------------------------------------------------------------------------
# Forward
# ---------------------------------------------------------------------------
def senet_forward(x, w1, w2):
    """x: (B, C, H, W); w1: (C//r, C); w2: (C, C//r). Matches PyTorch SEnet."""
    B, C, H, W = x.shape
    Cr = w1.shape[0]
    HW = H * W
    itemsize = x.dtype.itemsize

    x3d = x.reshape(B, C, HW)                                      # free reshape
    w1f = w1.astype(jnp.float32)                                   # (Cr, C)
    w2f = w2.astype(jnp.float32)                                   # (C, Cr)

    block_bytes, vmem_limit = _vmem_budget()

    # --- Primary: fused per-sample kernel (1 read + 1 write of x). ----------
    slab_bytes = C * HW * itemsize
    weight_bytes = 2 * C * Cr * 4
    fused_fits = (4 * slab_bytes + weight_bytes) <= (vmem_limit - (2 << 20))

    if fused_fits:
        cost = pl.CostEstimate(
            flops=int(B * (2 * C * HW + 4 * C * Cr)),
            transcendentals=int(B * C),
            bytes_accessed=int(2 * B * C * HW * itemsize + weight_bytes),
        )
        out3d = pl.pallas_call(
            _se_fused_kernel,
            out_shape=jax.ShapeDtypeStruct((B, C, HW), x.dtype),
            grid=(B,),
            in_specs=[
                pl.BlockSpec((1, C, HW), lambda b: (b, 0, 0)),
                pl.BlockSpec((Cr, C), lambda b: (0, 0)),   # resident across grid
                pl.BlockSpec((C, Cr), lambda b: (0, 0)),   # resident across grid
            ],
            out_specs=pl.BlockSpec((1, C, HW), lambda b: (b, 0, 0)),
            compiler_params=pltpu.CompilerParams(
                dimension_semantics=("parallel",),
                vmem_limit_bytes=vmem_limit,
            ),
            cost_estimate=cost,
        )(x3d, w1f, w2f)
        return out3d.reshape(B, C, H, W)

    # --- Fallback: split path for very large per-sample slabs. --------------
    # squeeze + excitation in plain JAX (tiny output, XLA streams/fuses it).
    pooled = jnp.mean(x3d.astype(jnp.float32), axis=-1)            # (B, C) f32
    h = jnp.maximum(pooled @ w1f.T, 0.0)                           # (B, Cr)
    gates = jax.nn.sigmoid(h @ w2f.T)                              # (B, C) f32

    BC = B * C
    x2d = x3d.reshape(BC, HW)
    g2d = gates.reshape(BC, 1)                                     # f32 gate

    # Fixed, bandwidth-optimal tiles + cdiv grid (no divisor search).
    if HW < 128:
        lane_t = HW                                                # full-dim block (legal)
    else:
        lane_t = min(512, (HW // 128) * 128)
    row_t = max(8, (block_bytes // max(1, lane_t * itemsize)) // 8 * 8)
    if row_t >= BC:
        row_t = BC                                                 # full-dim block (legal)

    grid = (pl.cdiv(BC, row_t), pl.cdiv(HW, lane_t))               # lanes innermost
    cost = pl.CostEstimate(
        flops=int(BC * HW),
        transcendentals=0,
        bytes_accessed=int(2 * BC * HW * itemsize + BC * 4),
    )
    out2d = pl.pallas_call(
        _se_scale_kernel,
        out_shape=jax.ShapeDtypeStruct((BC, HW), x.dtype),
        grid=grid,
        in_specs=[
            pl.BlockSpec((row_t, lane_t), lambda i, j: (i, j)),
            pl.BlockSpec((row_t, 1), lambda i, j: (i, 0)),         # gate DMA elided over j
        ],
        out_specs=pl.BlockSpec((row_t, lane_t), lambda i, j: (i, j)),
        compiler_params=pltpu.CompilerParams(
            dimension_semantics=("parallel", "parallel"),
            vmem_limit_bytes=vmem_limit,
        ),
        cost_estimate=cost,
    )(x2d, g2d)
    return out2d.reshape(B, C, H, W)


# ---------------------------------------------------------------------------
# Pure-JAX reference (mirrors the PyTorch module)
# ---------------------------------------------------------------------------
def senet_reference(x, w1, w2):
    avg = jnp.mean(x, axis=(2, 3))                                 # (B, C)
    h = jnp.maximum(avg @ w1.T, 0.0)                               # (B, C//r)
    s = jax.nn.sigmoid(h @ w2.T)                                   # (B, C)
    return x * s[:, :, None, None]


if __name__ == "__main__":
    B, C, H, W = 2, 64, 16, 16          # HW = 256 -> lane-dense slabs
    ratio = 16
    Cr = C // ratio

    key = jax.random.PRNGKey(0)
    kx, k1, k2 = jax.random.split(key, 3)
    x = jax.random.normal(kx, (B, C, H, W), dtype=jnp.float32)
    # nn.Linear(channel, channel//ratio, bias=False) -> weight (C//r, C)
    w1 = jax.random.normal(k1, (Cr, C), dtype=jnp.float32) * 0.1
    # nn.Linear(channel//ratio, channel, bias=False) -> weight (C, C//r)
    w2 = jax.random.normal(k2, (C, Cr), dtype=jnp.float32) * 0.1

    out = jax.block_until_ready(senet_forward(x, w1, w2))
    ref = senet_reference(x, w1, w2)

    assert out.shape == (B, C, H, W)
    assert jnp.allclose(out, ref, atol=1e-5, rtol=1e-5), float(
        jnp.max(jnp.abs(out - ref)))

    print("KERNEL_OK")
</pallas_src>

<mosaic_0001>
module attributes {stable_mosaic.version = 11 : i64} {
  func.func @_se_fused_kernel(%arg0: i32, %arg1: memref<1x64x256xf32, #tpu.memory_space<vmem>>, %arg2: memref<4x64xf32, #tpu.memory_space<vmem>>, %arg3: memref<64x4xf32, #tpu.memory_space<vmem>>, %arg4: memref<1x64x256xf32, #tpu.memory_space<vmem>>) attributes {dimension_semantics = [#tpu.dimension_semantics<parallel>], iteration_bounds = array<i64: 2>, scalar_prefetch = 0 : i64, scratch_operands = 0 : i64, tpu.core_type = #tpu.core_type<tc>, window_params = [{transform_indices = @transform_0, window_bounds = array<i64: 1, 64, 256>}, {pipeline_mode = #tpu.pipeline_mode<synchronous>, transform_indices = @transform_1, window_bounds = array<i64: 4, 64>}, {pipeline_mode = #tpu.pipeline_mode<synchronous>, transform_indices = @transform_2, window_bounds = array<i64: 64, 4>}, {transform_indices = @transform_3, window_bounds = array<i64: 1, 64, 256>}]} {
    %c0 = arith.constant 0 : index
    %c0_0 = arith.constant 0 : index
    %c0_1 = arith.constant 0 : index
    %0 = vector.load %arg1[%c0, %c0_0, %c0_1] : memref<1x64x256xf32, #tpu.memory_space<vmem>>, vector<1x64x256xf32>
    %1 = vector.shape_cast %0 : vector<1x64x256xf32> to vector<64x256xf32>
    %cst = arith.constant dense<0.000000e+00> : vector<64xf32>
    %2 = vector.multi_reduction <add>, %1, %cst [1] : vector<64x256xf32> to vector<64xf32>
    %3 = vector.shape_cast %2 : vector<64xf32> to vector<64x1xf32>
    %cst_2 = arith.constant 2.560000e+02 : f32
    %4 = vector.broadcast %cst_2 : f32 to vector<64x1xf32>
    %5 = arith.divf %3, %4 : vector<64x1xf32>
    %c0_3 = arith.constant 0 : index
    %c0_4 = arith.constant 0 : index
    %6 = vector.load %arg2[%c0_3, %c0_4] : memref<4x64xf32, #tpu.memory_space<vmem>>, vector<4x64xf32>
    %cst_5 = arith.constant dense<0.000000e+00> : vector<4x1xf32>
    %7 = tpu.matmul %6, %5, %cst_5 {dimension_numbers = #tpu.dot_dimension_numbers<[1], [0], [0], [1], [0, 0, 1, 1], [], []>} : vector<4x64xf32>, vector<64x1xf32>, vector<4x1xf32> -> vector<4x1xf32>
    %cst_6 = arith.constant 0.000000e+00 : f32
    %8 = vector.broadcast %cst_6 : f32 to vector<4x1xf32>
    %9 = arith.maximumf %7, %8 : vector<4x1xf32>
    %c0_7 = arith.constant 0 : index
    %c0_8 = arith.constant 0 : index
    %10 = vector.load %arg3[%c0_7, %c0_8] : memref<64x4xf32, #tpu.memory_space<vmem>>, vector<64x4xf32>
    %cst_9 = arith.constant dense<0.000000e+00> : vector<64x1xf32>
    %11 = tpu.matmul %10, %9, %cst_9 {dimension_numbers = #tpu.dot_dimension_numbers<[1], [0], [0], [1], [0, 0, 1, 1], [], []>} : vector<64x4xf32>, vector<4x1xf32>, vector<64x1xf32> -> vector<64x1xf32>
    %12 = arith.negf %11 : vector<64x1xf32>
    %13 = math.exp %12 : vector<64x1xf32>
    %cst_10 = arith.constant 1.000000e+00 : f32
    %14 = vector.broadcast %cst_10 : f32 to vector<64x1xf32>
    %15 = arith.addf %14, %13 : vector<64x1xf32>
    %16 = arith.divf %14, %15 : vector<64x1xf32>
    %17 = vector.broadcast %16 : vector<64x1xf32> to vector<64x256xf32>
    %18 = arith.mulf %1, %17 : vector<64x256xf32>
    %c0_11 = arith.constant 0 : index
    %c0_12 = arith.constant 0 : index
    %c0_13 = arith.constant 0 : index
    %19 = vector.load %arg4[%c0_11, %c0_12, %c0_13] : memref<1x64x256xf32, #tpu.memory_space<vmem>>, vector<1x64x256xf32>
    %20 = vector.shape_cast %19 : vector<1x64x256xf32> to vector<64x256xf32>
    %21 = vector.shape_cast %18 : vector<64x256xf32> to vector<1x64x256xf32>
    tpu.vector_store %arg4[%c0_11, %c0_12, %c0_13], %21 {strides = array<i32>} : memref<1x64x256xf32, #tpu.memory_space<vmem>>, vector<1x64x256xf32>,
    return
  }
  func.func @transform_0(%arg0: i32) -> (i32, i32, i32) {
    %c0_i32 = arith.constant 0 : i32
    %c0_i32_0 = arith.constant 0 : i32
    %c0_i32_1 = arith.constant 0 : i32
    return %arg0, %c0_i32, %c0_i32_0 : i32, i32, i32
  }
  func.func @transform_1(%arg0: i32) -> (i32, i32) {
    %c0_i32 = arith.constant 0 : i32
    %c0_i32_0 = arith.constant 0 : i32
    %c0_i32_1 = arith.constant 0 : i32
    return %c0_i32, %c0_i32_0 : i32, i32
  }
  func.func @transform_2(%arg0: i32) -> (i32, i32) {
    %c0_i32 = arith.constant 0 : i32
    %c0_i32_0 = arith.constant 0 : i32
    %c0_i32_1 = arith.constant 0 : i32
    return %c0_i32, %c0_i32_0 : i32, i32
  }
  func.func @transform_3(%arg0: i32) -> (i32, i32, i32) {
    %c0_i32 = arith.constant 0 : i32
    %c0_i32_0 = arith.constant 0 : i32
    %c0_i32_1 = arith.constant 0 : i32
    return %arg0, %c0_i32, %c0_i32_0 : i32, i32, i32
  }
}

</mosaic_0001>

<llo_original>
// kernel: tpu_custom_call.1
$region0: #{tpu_custom_call.1}
  #allocation0 [shape = 'u32[]', space=smem, size = 0x4, offset = 0x4, fixed_abs, tag = 'smem constant byte address 0x4 - core index']
  #allocation1 [shape = 'u32[144,128]{1,0:T(1,128)}', space=vmem, size = 0x12000, scoped, tag = 'internal scratch']
  %s0 = inlined_call_operand.hbm [shape: f32[2,64,256], index: 0, kind: input, shape index: {}]
  %s1 = inlined_call_operand.vmem [shape: f32[4,64], index: 1, kind: input, shape index: {}]
  %s2 = inlined_call_operand.vmem [shape: f32[64,4], index: 2, kind: input, shape index: {}]
  %s3 = inlined_call_operand.hbm [shape: f32[2,64,256], index: 3, kind: output, shape index: {}]
  %s4 = sld [smem:[#allocation0]]
  $region49: #{tpu_custom_call.1} parent=0
    _
  %s6 = ssub.s32 1, %s4
  %s7 = scalar_select 0, %s6, %s4
  $region1: #{tpu_custom_call.1} parent=0
    #allocation2 [shape = 'u8[131072]{0}', space=vmem, size = 0x20000, scoped, tag = 'input window, operand 0']
    #allocation3 [shape = 's32[2]{0}', space=sflag, size = 0x8, scoped, tag = 'scoped memory for tpu_custom_call.1']
    #allocation4 [shape = 's32[2]{0}', space=sflag, size = 0x8, scoped, tag = 'scoped memory for tpu_custom_call.1']
    #allocation5 [shape = 'u8[131072]{0}', space=vmem, size = 0x20000, scoped, tag = 'output window, operand 0']
    %8 = vsyncpa [#allocation3], 0
    %s9 = scalar_lea.sflag [#allocation3], 1
    %10 = vsyncpa %s9, 0
    %11 = vsyncpa [#allocation4], 0
    %s12 = scalar_lea.sflag [#allocation4], 1
    %13 = vsyncpa %s12, 0
    loop: start=0, step=1, limit=4
    $region2: #{tpu_custom_call.1} parent=1 // loop_pre_header
      _
    $region3: #{tpu_custom_call.1} parent=1 // loop_header
      %s15 = sphi 0, %s19
      %p16 = scmp.ge.s32.totalorder %s15, 4
      %s25 = sphi 0, %s27
      %s28 = sphi 0, %s25
      %s29 = sphi 0, %s28
      %s45 = sphi 0, %s29
      %s49 = sphi 0, %s49
      %s51 = sphi 0, %s49
      %s52 = sphi 0, %s51
      %s66 = sphi 0, %s52
      %s70 = sphi 0, %s70
      %s72 = sphi 0, %s70
      %s73 = sphi 0, %s72
      %s87 = sphi 0, %s73
      %s93 = sphi 0, %s95
      %s96 = sphi 0, %s93
      %s97 = sphi 0, %s96
      %s113 = sphi 0, %s97
    $region4: #{tpu_custom_call.1} parent=1 // loop_header_branch
      %18 = sbr.rel (%p16) target = $region8
    $region5: #{tpu_custom_call.1} parent=1 // loop_body
      %s20 = ssub.s32 %s15, 1
      %s21 = ssub.s32 %s15, 2
      %s22 = sadd.s32 %s15, 1
      %s23 = ssub.s32 %s15, %s22
      %p24 = scmp.eq.s32.totalorder %s23, 0
      %s26 = sadd.s32 %s25, 1
      %s27 = scalar_select %p24, %s25, %s26
      %p30 = pneg %p24
      %p31 = scmp.eq.s32.totalorder %s15, 1
      %p32 = por %p30, %p31
      %p33 = scmp.ne.s32.totalorder %s25, %s28
      %p34 = scmp.eq.s32.totalorder %s15, 0
      %p35 = por %p33, %p34
      %p36 = scmp.ne.s32.totalorder %s25, %s28
      %p37 = scmp.eq.s32.totalorder %s20, 1
      %p38 = por %p36, %p37
      %p39 = scmp.ne.s32.totalorder %s28, %s29
      %p40 = scmp.eq.s32.totalorder %s20, 0
      %p41 = por %p39, %p40
      %p42 = scmp.ne.s32.totalorder %s28, %s29
      %p43 = scmp.eq.s32.totalorder %s21, 1
      %p44 = por %p42, %p43
      %p46 = scmp.ne.s32.totalorder %s29, %s45
      %p47 = scmp.eq.s32.totalorder %s21, 0
      %p48 = por %p46, %p47
      %s50 = sadd.s32 %s49, 1
      %p53 = scmp.eq.s32.totalorder %s15, 1
      %p54 = scmp.ne.s32.totalorder %s49, %s51
      %p55 = scmp.eq.s32.totalorder %s15, 0
      %p56 = por %p54, %p55
      %p57 = scmp.ne.s32.totalorder %s49, %s51
      %p58 = scmp.eq.s32.totalorder %s20, 1
      %p59 = por %p57, %p58
      %p60 = scmp.ne.s32.totalorder %s51, %s52
      %p61 = scmp.eq.s32.totalorder %s20, 0
      %p62 = por %p60, %p61
      %p63 = scmp.ne.s32.totalorder %s51, %s52
      %p64 = scmp.eq.s32.totalorder %s21, 1
      %p65 = por %p63, %p64
      %p67 = scmp.ne.s32.totalorder %s52, %s66
      %p68 = scmp.eq.s32.totalorder %s21, 0
      %p69 = por %p67, %p68
      %s71 = sadd.s32 %s70, 1
      %p74 = scmp.eq.s32.totalorder %s15, 1
      %p75 = scmp.ne.s32.totalorder %s70, %s72
      %p76 = scmp.eq.s32.totalorder %s15, 0
      %p77 = por %p75, %p76
      %p78 = scmp.ne.s32.totalorder %s70, %s72
      %p79 = scmp.eq.s32.totalorder %s20, 1
      %p80 = por %p78, %p79
      %p81 = scmp.ne.s32.totalorder %s72, %s73
      %p82 = scmp.eq.s32.totalorder %s20, 0
      %p83 = por %p81, %p82
      %p84 = scmp.ne.s32.totalorder %s72, %s73
      %p85 = scmp.eq.s32.totalorder %s21, 1
      %p86 = por %p84, %p85
      %p88 = scmp.ne.s32.totalorder %s73, %s87
      %p89 = scmp.eq.s32.totalorder %s21, 0
      %p90 = por %p88, %p89
      %s91 = ssub.s32 %s15, %s22
      %p92 = scmp.eq.s32.totalorder %s91, 0
      %s94 = sadd.s32 %s93, 1
      %s95 = scalar_select %p92, %s93, %s94
      %p98 = pneg %p92
      %p99 = scmp.eq.s32.totalorder %s15, 1
      %p100 = por %p98, %p99
      %p101 = scmp.ne.s32.totalorder %s93, %s96
      %p102 = scmp.eq.s32.totalorder %s15, 0
      %p103 = por %p101, %p102
      %p104 = scmp.ne.s32.totalorder %s93, %s96
      %p105 = scmp.eq.s32.totalorder %s20, 1
      %p106 = por %p104, %p105
      %p107 = scmp.ne.s32.totalorder %s96, %s97
      %p108 = scmp.eq.s32.totalorder %s20, 0
      %p109 = por %p107, %p108
      %p110 = scmp.ne.s32.totalorder %s96, %s97
      %p111 = scmp.eq.s32.totalorder %s21, 1
      %p112 = por %p110, %p111
      %p114 = scmp.ne.s32.totalorder %s97, %s113
      %p115 = scmp.eq.s32.totalorder %s21, 0
      %p116 = por %p114, %p115
      %p117 = scmp.le.s32.totalorder 1, %s15
      %p118 = scmp.lt.s32.totalorder %s15, 3
      %p119 = pnand %p117, %p118
      %p120 = pneg %p119
      // Predicated region
      $region9: #{tpu_custom_call.1} parent=5 // pred_check
        _
      $region10: #{tpu_custom_call.1} parent=5 // pred_check_branch
        %122 = sbr.rel (%p119) target = $region12
      $region11: #{tpu_custom_call.1} parent=5 // pred_region
        %s123 = ssub.s32 %s15, 1
        // Predicated region
        $region13: #{tpu_custom_call.1} parent=11 // pred_check
          %p124 = pneg %p62
        $region14: #{tpu_custom_call.1} parent=11 // pred_check_branch
          %126 = sbr.rel (%p124) target = $region16
        $region15: #{tpu_custom_call.1} parent=11 // pred_region
          _
        $region16: #{tpu_custom_call.1} parent=11 // pred_fallthru
          _
        // Predicated region
        $region17: #{tpu_custom_call.1} parent=11 // pred_check
          %p127 = pneg %p83
        $region18: #{tpu_custom_call.1} parent=11 // pred_check_branch
          %129 = sbr.rel (%p127) target = $region20
        $region19: #{tpu_custom_call.1} parent=11 // pred_region
          _
        $region20: #{tpu_custom_call.1} parent=11 // pred_fallthru
          _
      $region12: #{tpu_custom_call.1} parent=5 // pred_fallthru
        _
      %p130 = scmp.lt.s32.totalorder %s15, 2
      // Predicated region
      $region21: #{tpu_custom_call.1} parent=5 // pred_check
        %p131 = pneg %p130
      $region22: #{tpu_custom_call.1} parent=5 // pred_check_branch
        %133 = sbr.rel (%p131) target = $region24
      $region23: #{tpu_custom_call.1} parent=5 // pred_region
        // Predicated region
        $region25: #{tpu_custom_call.1} parent=23 // pred_check
          %p134 = pneg %p35
        $region26: #{tpu_custom_call.1} parent=23 // pred_check_branch
          %136 = sbr.rel (%p134) target = $region28
        $region27: #{tpu_custom_call.1} parent=23 // pred_region
          %s137 = sand.u32 %s25, 1
          %s138 = scalar_lea.sflag [#allocation3], %s137
          %s139 = sand.u32 %s25, 1
          %s140 = smul.addr %s139, 128
          %s141 = scalar_lea.vmem [#allocation2], %s140
          %s143 = ssub.s32 2048, 2048
          %144 = vsyncadd %s138, %s143
          %s145 = smul.addr %s15, 16
          %s146 = smul.addr %s145, 128
          %s147 = scalar_lea.hbm %s0, %s146
          %s148 = sshll.u32 %s141, 4
          %s149 = int_to_ptr.vmem [resolvable:$true] %s148
          %154 = dma.hbm_to_vmem [thread:$0]  %s147, 2048, %s149, %s138, 256, 256, 16
        $region28: #{tpu_custom_call.1} parent=23 // pred_fallthru
          _
      $region24: #{tpu_custom_call.1} parent=5 // pred_fallthru
        _
      %p155 = scmp.le.s32.totalorder 1, %s15
      %p156 = scmp.lt.s32.totalorder %s15, 3
      %p157 = pnand %p155, %p156
      %p158 = pneg %p157
      // Predicated region
      $region29: #{tpu_custom_call.1} parent=5 // pred_check
        _
      $region30: #{tpu_custom_call.1} parent=5 // pred_check_branch
        %160 = sbr.rel (%p157) target = $region32
      $region31: #{tpu_custom_call.1} parent=5 // pred_region
        %s161 = ssub.s32 %s15, 1
        %s162 = sand.u32 %s28, 1
        %s163 = scalar_lea.sflag [#allocation3], %s162
        %s164 = sand.u32 %s28, 1
        %s165 = smul.addr %s164, 128
        %s166 = scalar_lea.vmem [#allocation2], %s165
        // Predicated region
        $region33: #{tpu_custom_call.1} parent=31 // pred_check
          %p167 = pneg %p41
        $region34: #{tpu_custom_call.1} parent=31 // pred_check_branch
          %169 = sbr.rel (%p167) target = $region36
        $region35: #{tpu_custom_call.1} parent=31 // pred_region
          %170 = dma.done %s163, 2048
        $region36: #{tpu_custom_call.1} parent=31 // pred_fallthru
          _
        %s171 = sand.u32 %s28, 1
        %s172 = scalar_lea.sflag [#allocation3], %s171
        %s173 = sand.u32 %s28, 1
        %s174 = smul.addr %s173, 128
        %s175 = scalar_lea.vmem [#allocation2], %s174
        %p176 = pneg %p41
        %p177 = pneg %p38
        %p178 = pneg %p62
        %p179 = pneg %p59
        %p180 = pneg %p83
        %p181 = pneg %p80
        %p182 = pneg %p109
        %p183 = pneg %p106
        %s184 = sand.u32 %s96, 1
        %s185 = scalar_lea.sflag [#allocation4], %s184
        %s186 = sand.u32 %s96, 1
        %s187 = smul.addr %s186, 128
        %s188 = scalar_lea.vmem [#allocation5], %s187
        %v189 = vld [vmem:[%s166] sm:$0xff]
        %v190 = vld [vmem:[%s166 + $0x8] sm:$0xff]
        %v191 = vld [vmem:[%s166 + $0x10] sm:$0xff]
        %v192 = vld [vmem:[%s166 + $0x18] sm:$0xff]
        %v193 = vld [vmem:[%s166 + $0x20] sm:$0xff]
        %v194 = vld [vmem:[%s166 + $0x28] sm:$0xff]
        %v195 = vld [vmem:[%s166 + $0x30] sm:$0xff]
        %v196 = vld [vmem:[%s166 + $0x38] sm:$0xff]
        %v197 = vld [vmem:[%s166 + $0x40] sm:$0xff]
        %v198 = vld [vmem:[%s166 + $0x48] sm:$0xff]
        %v199 = vld [vmem:[%s166 + $0x50] sm:$0xff]
        %v200 = vld [vmem:[%s166 + $0x58] sm:$0xff]
        %v201 = vld [vmem:[%s166 + $0x60] sm:$0xff]
        %v202 = vld [vmem:[%s166 + $0x68] sm:$0xff]
        %v203 = vld [vmem:[%s166 + $0x70] sm:$0xff]
        %v204 = vld [vmem:[%s166 + $0x78] sm:$0xff]
        %v205 = vadd.f32 %v189, %v190
        %206 = vadd.xlane.f32.xlu0 %v205
        %v207 = vpop.xlane.xlu0 %206
        %v208 = vadd.f32 %v191, %v192
        %209 = vadd.xlane.f32.xlu0 %v208
        %v210 = vpop.xlane.xlu0 %209
        %v211 = vadd.f32 %v193, %v194
        %212 = vadd.xlane.f32.xlu0 %v211
        %v213 = vpop.xlane.xlu0 %212
        %v214 = vadd.f32 %v195, %v196
        %215 = vadd.xlane.f32.xlu0 %v214
        %v216 = vpop.xlane.xlu0 %215
        %v217 = vadd.f32 %v197, %v198
        %218 = vadd.xlane.f32.xlu0 %v217
        %v219 = vpop.xlane.xlu0 %218
        %v220 = vadd.f32 %v199, %v200
        %221 = vadd.xlane.f32.xlu0 %v220
        %v222 = vpop.xlane.xlu0 %221
        %v223 = vadd.f32 %v201, %v202
        %224 = vadd.xlane.f32.xlu0 %v223
        %v225 = vpop.xlane.xlu0 %224
        %v226 = vadd.f32 %v203, %v204
        %227 = vadd.xlane.f32.xlu0 %v226
        %v228 = vpop.xlane.xlu0 %227
        %v229 = vrcp.pop 256.0
        %v230 = vmul.f32 %v207, %v229
        %v231 = vmul.f32 %v210, %v229
        %v232 = vmul.f32 %v213, %v229
        %v233 = vmul.f32 %v216, %v229
        %v234 = vmul.f32 %v219, %v229
        %v235 = vmul.f32 %v222, %v229
        %v236 = vmul.f32 %v225, %v229
        %v237 = vmul.f32 %v228, %v229
        %v238 = vld [vmem:[%s1] sm:$0xf]
        %vm239 = vcmask 523264
        %v241 = vsel %vm239, %v238, 0
        %243 = vmatprep.subr.mxu0 0.0
        %244 = vmatpush1.msra.mxu0 0.0
        %245 = vmatprep.subr.mxu0 0.0
        %246 = vmatpush1.msra.mxu0 0.0
        %247 = vmatprep.subr.mxu0 0.0
        %248 = vmatpush1.msra.mxu0 0.0
        %249 = vmatprep.subr.mxu0 0.0
        %250 = vmatpush1.msra.mxu0 0.0
        %251 = vmatprep.subr.mxu0 0.0
        %252 = vmatpush1.msra.mxu0 0.0
        %253 = vmatprep.subr.mxu0 0.0
        %254 = vmatpush1.msra.mxu0 0.0
        %255 = vmatprep.subr.mxu0 0.0
        %256 = vmatpush1.msra.mxu0 0.0
        %257 = vmatprep.subr.mxu0 0.0
        %258 = vmatpush1.msra.mxu0 0.0
        %259 = vmatprep.subr.mxu0 0.0
        %260 = vmatpush1.msra.mxu0 %v237
        %261 = vmatprep.subr.mxu0 0.0
        %262 = vmatpush1.msra.mxu0 %v236
        %263 = vmatprep.subr.mxu0 0.0
        %264 = vmatpush1.msra.mxu0 %v235
        %265 = vmatprep.subr.mxu0 0.0
        %266 = vmatpush1.msra.mxu0 %v234
        %267 = vmatprep.subr.mxu0 0.0
        %268 = vmatpush1.msra.mxu0 %v233
        %269 = vmatprep.subr.mxu0 0.0
        %270 = vmatpush1.msra.mxu0 %v232
        %271 = vmatprep.subr.mxu0 0.0
        %272 = vmatpush1.msra.mxu0 %v231
        %273 = vmatprep.subr.mxu0 0.0
        %274 = vmatpush1.msra.mxu0 %v230
        %275 = vmatprep.subr.mxu0 0.0
        %276 = vmatpush2.msra.mxu0 0.0
        %277 = vmatprep.subr.mxu0 0.0
        %278 = vmatpush2.msra.mxu0 0.0
        %279 = vmatprep.subr.mxu0 0.0
        %280 = vmatpush2.msra.mxu0 0.0
        %281 = vmatprep.subr.mxu0 0.0
        %282 = vmatpush2.msra.mxu0 0.0
        %283 = vmatprep.subr.mxu0 0.0
        %284 = vmatpush2.msra.mxu0 0.0
        %285 = vmatprep.subr.mxu0 0.0
        %286 = vmatpush2.msra.mxu0 0.0
        %287 = vmatprep.subr.mxu0 0.0
        %288 = vmatpush2.msra.mxu0 0.0
        %289 = vmatprep.subr.mxu0 0.0
        %290 = vmatpush2.msra.mxu0 0.0
        %291 = vmatprep.subr.mxu0 0.0
        %292 = vmatpush2.msra.mxu0 0.0
        %293 = vmatprep.subr.mxu0 0.0
        %294 = vmatpush2.msra.mxu0 0.0
        %295 = vmatprep.subr.mxu0 0.0
        %296 = vmatpush2.msra.mxu0 0.0
        %297 = vmatprep.subr.mxu0 0.0
        %298 = vmatpush2.msra.mxu0 0.0
        %299 = vmatprep.subr.mxu0 0.0
        %300 = vmatpush2.msra.mxu0 0.0
        %301 = vmatprep.subr.mxu0 0.0
        %302 = vmatpush2.msra.mxu0 0.0
        %303 = vmatprep.subr.mxu0 0.0
        %304 = vmatpush2.msra.mxu0 0.0
        %305 = vmatprep.subr.mxu0 0.0
        %306 = vmatpush2.msra.mxu0 0.0
        %307 = vmatprep.mubr.f32.mxu0 0.0
        %308 = vmatmul.mubr.f32.gmra.mxu0 %v241
        %v309 = vpop.f32.mrf.mxu0
        %v310 = vadd.f32 0.0, %v309
        %v311 = vpop.f32.mrf.mxu0
        %312 = vdwg.mxu0
        %v313 = vmax.f32 %v310, 0.0
        %v314 = vld [vmem:[%s2] sm:$0xff]
        %v315 = vld [vmem:[%s2 + $0x8] sm:$0xff]
        %v316 = vld [vmem:[%s2 + $0x10] sm:$0xff]
        %v317 = vld [vmem:[%s2 + $0x18] sm:$0xff]
        %v318 = vld [vmem:[%s2 + $0x20] sm:$0xff]
        %v319 = vld [vmem:[%s2 + $0x28] sm:$0xff]
        %v320 = vld [vmem:[%s2 + $0x30] sm:$0xff]
        %v321 = vld [vmem:[%s2 + $0x38] sm:$0xff]
        %vm322 = vcmask 31744
        %v324 = vsel %vm322, %v314, 0
        %v327 = vsel %vm322, %v315, 0
        %v330 = vsel %vm322, %v316, 0
        %v333 = vsel %vm322, %v317, 0
        %v336 = vsel %vm322, %v318, 0
        %v339 = vsel %vm322, %v319, 0
        %v342 = vsel %vm322, %v320, 0
        %v345 = vsel %vm322, %v321, 0
        %vm347 = vcmask 1043456
        %v349 = vsel %vm347, %v313, 0
        %351 = vmatprep.subr.mxu0 0.0
        %352 = vmatpush1.msra.mxu0 0.0
        %353 = vmatprep.subr.mxu0 0.0
        %354 = vmatpush1.msra.mxu0 0.0
        %355 = vmatprep.subr.mxu0 0.0
        %356 = vmatpush1.msra.mxu0 0.0
        %357 = vmatprep.subr.mxu0 0.0
        %358 = vmatpush1.msra.mxu0 0.0
        %359 = vmatprep.subr.mxu0 0.0
        %360 = vmatpush1.msra.mxu0 0.0
        %361 = vmatprep.subr.mxu0 0.0
        %362 = vmatpush1.msra.mxu0 0.0
        %363 = vmatprep.subr.mxu0 0.0
        %364 = vmatpush1.msra.mxu0 0.0
        %365 = vmatprep.subr.mxu0 0.0
        %366 = vmatpush1.msra.mxu0 0.0
        %367 = vmatprep.subr.mxu0 0.0
        %368 = vmatpush1.msra.mxu0 0.0
        %369 = vmatprep.subr.mxu0 0.0
        %370 = vmatpush1.msra.mxu0 0.0
        %371 = vmatprep.subr.mxu0 0.0
        %372 = vmatpush1.msra.mxu0 0.0
        %373 = vmatprep.subr.mxu0 0.0
        %374 = vmatpush1.msra.mxu0 0.0
        %375 = vmatprep.subr.mxu0 0.0
        %376 = vmatpush1.msra.mxu0 0.0
        %377 = vmatprep.subr.mxu0 0.0
        %378 = vmatpush1.msra.mxu0 0.0
        %379 = vmatprep.subr.mxu0 0.0
        %380 = vmatpush1.msra.mxu0 0.0
        %381 = vmatprep.subr.mxu0 0.0
        %382 = vmatpush1.msra.mxu0 %v349
        %383 = vmatprep.subr.mxu0 0.0
        %384 = vmatpush2.msra.mxu0 0.0
        %385 = vmatprep.subr.mxu0 0.0
        %386 = vmatpush2.msra.mxu0 0.0
        %387 = vmatprep.subr.mxu0 0.0
        %388 = vmatpush2.msra.mxu0 0.0
        %389 = vmatprep.subr.mxu0 0.0
        %390 = vmatpush2.msra.mxu0 0.0
        %391 = vmatprep.subr.mxu0 0.0
        %392 = vmatpush2.msra.mxu0 0.0
        %393 = vmatprep.subr.mxu0 0.0
        %394 = vmatpush2.msra.mxu0 0.0
        %395 = vmatprep.subr.mxu0 0.0
        %396 = vmatpush2.msra.mxu0 0.0
        %397 = vmatprep.subr.mxu0 0.0
        %398 = vmatpush2.msra.mxu0 0.0
        %399 = vmatprep.subr.mxu0 0.0
        %400 = vmatpush2.msra.mxu0 0.0
        %401 = vmatprep.subr.mxu0 0.0
        %402 = vmatpush2.msra.mxu0 0.0
        %403 = vmatprep.subr.mxu0 0.0
        %404 = vmatpush2.msra.mxu0 0.0
        %405 = vmatprep.subr.mxu0 0.0
        %406 = vmatpush2.msra.mxu0 0.0
        %407 = vmatprep.subr.mxu0 0.0
        %408 = vmatpush2.msra.mxu0 0.0
        %409 = vmatprep.subr.mxu0 0.0
        %410 = vmatpush2.msra.mxu0 0.0
        %411 = vmatprep.subr.mxu0 0.0
        %412 = vmatpush2.msra.mxu0 0.0
        %413 = vmatprep.subr.mxu0 0.0
        %414 = vmatpush2.msra.mxu0 0.0
        %415 = vmatprep.mubr.f32.mxu0 0.0
        %416 = vmatmul.mubr.f32.gmra.mxu0 %v324
        %v417 = vpop.f32.mrf.mxu0
        %v418 = vadd.f32 0.0, %v417
        %v419 = vpop.f32.mrf.mxu0
        %420 = vmatprep.mubr.f32.mxu0 0.0
        %421 = vmatmul.mubr.f32.gmra.mxu0 %v327
        %v422 = vpop.f32.mrf.mxu0
        %v423 = vadd.f32 0.0, %v422
        %v424 = vpop.f32.mrf.mxu0
        %425 = vmatprep.mubr.f32.mxu0 0.0
        %426 = vmatmul.mubr.f32.gmra.mxu0 %v330
        %v427 = vpop.f32.mrf.mxu0
        %v428 = vadd.f32 0.0, %v427
        %v429 = vpop.f32.mrf.mxu0
        %430 = vmatprep.mubr.f32.mxu0 0.0
        %431 = vmatmul.mubr.f32.gmra.mxu0 %v333
        %v432 = vpop.f32.mrf.mxu0
        %v433 = vadd.f32 0.0, %v432
        %v434 = vpop.f32.mrf.mxu0
        %435 = vmatprep.mubr.f32.mxu0 0.0
        %436 = vmatmul.mubr.f32.gmra.mxu0 %v336
        %v437 = vpop.f32.mrf.mxu0
        %v438 = vadd.f32 0.0, %v437
        %v439 = vpop.f32.mrf.mxu0
        %440 = vmatprep.mubr.f32.mxu0 0.0
        %441 = vmatmul.mubr.f32.gmra.mxu0 %v339
        %v442 = vpop.f32.mrf.mxu0
        %v443 = vadd.f32 0.0, %v442
        %v444 = vpop.f32.mrf.mxu0
        %445 = vmatprep.mubr.f32.mxu0 0.0
        %446 = vmatmul.mubr.f32.gmra.mxu0 %v342
        %v447 = vpop.f32.mrf.mxu0
        %v448 = vadd.f32 0.0, %v447
        %v449 = vpop.f32.mrf.mxu0
        %450 = vmatprep.mubr.f32.mxu0 0.0
        %451 = vmatmul.mubr.f32.gmra.mxu0 %v345
        %v452 = vpop.f32.mrf.mxu0
        %v453 = vadd.f32 0.0, %v452
        %v454 = vpop.f32.mrf.mxu0
        %455 = vdwg.mxu0
        %v456 = vxor.u32 %v418, 2147483648
        %v457 = vxor.u32 %v423, 2147483648
        %v458 = vxor.u32 %v428, 2147483648
        %v459 = vxor.u32 %v433, 2147483648
        %v460 = vxor.u32 %v438, 2147483648
        %v461 = vxor.u32 %v443, 2147483648
        %v462 = vxor.u32 %v448, 2147483648
        %v463 = vxor.u32 %v453, 2147483648
        %v464 = vmul.f32 %v456, 1.442695
        %v465 = vpow.pop %v464
        %v466 = vmul.f32 %v457, 1.442695
        %v467 = vpow.pop %v466
        %v468 = vmul.f32 %v458, 1.442695
        %v469 = vpow.pop %v468
        %v470 = vmul.f32 %v459, 1.442695
        %v471 = vpow.pop %v470
        %v472 = vmul.f32 %v460, 1.442695
        %v473 = vpow.pop %v472
        %v474 = vmul.f32 %v461, 1.442695
        %v475 = vpow.pop %v474
        %v476 = vmul.f32 %v462, 1.442695
        %v477 = vpow.pop %v476
        %v478 = vmul.f32 %v463, 1.442695
        %v479 = vpow.pop %v478
        %v480 = vadd.f32 %v465, 1.0
        %v481 = vadd.f32 %v467, 1.0
        %v482 = vadd.f32 %v469, 1.0
        %v483 = vadd.f32 %v471, 1.0
        %v484 = vadd.f32 %v473, 1.0
        %v485 = vadd.f32 %v475, 1.0
        %v486 = vadd.f32 %v477, 1.0
        %v487 = vadd.f32 %v479, 1.0
        %v488 = vrcp.pop %v480
        %v489 = vmul.f32 1.0, %v488
        %v490 = vrcp.pop %v481
        %v491 = vmul.f32 1.0, %v490
        %v492 = vrcp.pop %v482
        %v493 = vmul.f32 1.0, %v492
        %v494 = vrcp.pop %v483
        %v495 = vmul.f32 1.0, %v494
        %v496 = vrcp.pop %v484
        %v497 = vmul.f32 1.0, %v496
        %v498 = vrcp.pop %v485
        %v499 = vmul.f32 1.0, %v498
        %v500 = vrcp.pop %v486
        %v501 = vmul.f32 1.0, %v500
        %v502 = vrcp.pop %v487
        %v503 = vmul.f32 1.0, %v502
        %505 = vset.pattern.permute.xlu0 0
        %506 = vperm.xlu0 %505, %v489
        %v507 = vpop.permute.xlu0 %506
        %510 = vset.pattern.permute.xlu0 0
        %511 = vperm.xlu0 %510, %v491
        %v512 = vpop.permute.xlu0 %511
        %515 = vset.pattern.permute.xlu0 0
        %516 = vperm.xlu0 %515, %v493
        %v517 = vpop.permute.xlu0 %516
        %520 = vset.pattern.permute.xlu0 0
        %521 = vperm.xlu0 %520, %v495
        %v522 = vpop.permute.xlu0 %521
        %525 = vset.pattern.permute.xlu0 0
        %526 = vperm.xlu0 %525, %v497
        %v527 = vpop.permute.xlu0 %526
        %530 = vset.pattern.permute.xlu0 0
        %531 = vperm.xlu0 %530, %v499
        %v532 = vpop.permute.xlu0 %531
        %535 = vset.pattern.permute.xlu0 0
        %536 = vperm.xlu0 %535, %v501
        %v537 = vpop.permute.xlu0 %536
        %540 = vset.pattern.permute.xlu0 0
        %541 = vperm.xlu0 %540, %v503
        %v542 = vpop.permute.xlu0 %541
        %v544 = vmul.f32 %v189, %v507
        %v545 = vmul.f32 %v190, %v507
        %v546 = vmul.f32 %v191, %v512
        %v547 = vmul.f32 %v192, %v512
        %v548 = vmul.f32 %v193, %v517
        %v549 = vmul.f32 %v194, %v517
        %v550 = vmul.f32 %v195, %v522
        %v551 = vmul.f32 %v196, %v522
        %v552 = vmul.f32 %v197, %v527
        %v553 = vmul.f32 %v198, %v527
        %v554 = vmul.f32 %v199, %v532
        %v555 = vmul.f32 %v200, %v532
        %v556 = vmul.f32 %v201, %v537
        %v557 = vmul.f32 %v202, %v537
        %v558 = vmul.f32 %v203, %v542
        %v559 = vmul.f32 %v204, %v542
        %560 = vst [vmem:[%s188] sm:$0xff] %v544
        %561 = vst [vmem:[%s188 + $0x8] sm:$0xff] %v545
        %562 = vst [vmem:[%s188 + $0x10] sm:$0xff] %v546
        %563 = vst [vmem:[%s188 + $0x18] sm:$0xff] %v547
        %564 = vst [vmem:[%s188 + $0x20] sm:$0xff] %v548
        %565 = vst [vmem:[%s188 + $0x28] sm:$0xff] %v549
        %566 = vst [vmem:[%s188 + $0x30] sm:$0xff] %v550
        %567 = vst [vmem:[%s188 + $0x38] sm:$0xff] %v551
        %568 = vst [vmem:[%s188 + $0x40] sm:$0xff] %v552
        %569 = vst [vmem:[%s188 + $0x48] sm:$0xff] %v553
        %570 = vst [vmem:[%s188 + $0x50] sm:$0xff] %v554
        %571 = vst [vmem:[%s188 + $0x58] sm:$0xff] %v555
        %572 = vst [vmem:[%s188 + $0x60] sm:$0xff] %v556
        %573 = vst [vmem:[%s188 + $0x68] sm:$0xff] %v557
        %574 = vst [vmem:[%s188 + $0x70] sm:$0xff] %v558
        %575 = vst [vmem:[%s188 + $0x78] sm:$0xff] %v559
        %s576 = sand.u32 %s96, 1
        %s577 = scalar_lea.sflag [#allocation4], %s576
        %s578 = sand.u32 %s96, 1
        %s579 = smul.addr %s578, 128
        %s580 = scalar_lea.vmem [#allocation5], %s579
        // Predicated region
        $region37: #{tpu_custom_call.1} parent=31 // pred_check
          %p581 = pneg %p106
        $region38: #{tpu_custom_call.1} parent=31 // pred_check_branch
          %583 = sbr.rel (%p581) target = $region40
        $region39: #{tpu_custom_call.1} parent=31 // pred_region
          %s585 = ssub.s32 2048, 2048
          %586 = vsyncadd %s577, %s585
          %s587 = smul.addr %s20, 16
          %s588 = smul.addr %s587, 128
          %s589 = scalar_lea.hbm %s3, %s588
          %s590 = sshll.u32 %s580, 4
          %s591 = int_to_ptr.vmem [resolvable:$true] %s590
          %596 = dma.vmem_to_hbm [thread:$0]  %s591, 2048, %s589, %s577, 256, 256, 16
        $region40: #{tpu_custom_call.1} parent=31 // pred_fallthru
          _
      $region32: #{tpu_custom_call.1} parent=5 // pred_fallthru
        _
      %p597 = scmp.le.s32.totalorder 2, %s15
      // Predicated region
      $region41: #{tpu_custom_call.1} parent=5 // pred_check
        %p598 = pneg %p597
      $region42: #{tpu_custom_call.1} parent=5 // pred_check_branch
        %600 = sbr.rel (%p598) target = $region44
      $region43: #{tpu_custom_call.1} parent=5 // pred_region
        %s601 = ssub.s32 %s15, 2
        // Predicated region
        $region45: #{tpu_custom_call.1} parent=43 // pred_check
          %p602 = pneg %p112
        $region46: #{tpu_custom_call.1} parent=43 // pred_check_branch
          %604 = sbr.rel (%p602) target = $region48
        $region47: #{tpu_custom_call.1} parent=43 // pred_region
          %s605 = sand.u32 %s97, 1
          %s606 = scalar_lea.sflag [#allocation4], %s605
          %s607 = sand.u32 %s97, 1
          %s608 = smul.addr %s607, 128
          %s609 = scalar_lea.vmem [#allocation5], %s608
          %610 = dma.done %s606, 2048
        $region48: #{tpu_custom_call.1} parent=43 // pred_fallthru
          _
      $region44: #{tpu_custom_call.1} parent=5 // pred_fallthru
        _
    $region6: #{tpu_custom_call.1} parent=1 // loop_footer
      %s19 = sadd.s32 1, %s15
    $region7: #{tpu_custom_call.1} parent=1 // loop_footer_branch
      %14 = sbr.rel target = $region3
    $region8: #{tpu_custom_call.1} parent=1 // loop_exit
      _
    %611 = vsyncpa [#allocation3], 1
    %s612 = scalar_lea.sflag [#allocation3], 1
    %613 = vsyncpa %s612, 1
    %614 = vsyncpa [#allocation4], 1
    %s615 = scalar_lea.sflag [#allocation4], 1
    %616 = vsyncpa %s615, 1

</llo_original>
